<compile_context>
chip_gen: v5e
topology: v5e:2x2
jax: 0.10.0
libtpu: 0.0.40
codegen_flags: <defaults>
</compile_context>

<pallas_src>
import functools

import jax
import jax.numpy as jnp
import numpy as np
from jax.experimental import pallas as pl
from jax.experimental.pallas import tpu as pltpu


@functools.lru_cache(maxsize=None)
def _selection_matrix_np(H, W):
    """(H*W, H2*W2) 0/1 matrix; column (i, j) selects source pixel (2i, 2j)."""
    H2, W2 = (H + 1) // 2, (W + 1) // 2
    sel = np.zeros((H * W, H2 * W2), dtype=np.float32)
    src = (2 * np.arange(H2)[:, None] * W + 2 * np.arange(W2)[None, :]).reshape(-1)
    sel[src, np.arange(H2 * W2)] = 1.0
    return sel


def _pick_batch_tile(B, C, C_out, HW, N_out, esize):
    """Batches per grid step.  Tiles cover whole batches so the fused channel
    padding is a static per-batch row pattern inside the kernel."""
    per_b = (C * HW + C_out * N_out) * esize        # in + out bytes for one batch
    # Double-buffered (in + out) stays ~<= 10 MiB -> fits v5e's 16 MiB scoped
    # VMEM default (v6e/v7x: 32 MiB) with headroom for sel and internal scratch.
    vmem_budget = 5 * 1024 * 1024
    bt = max(1, min(B, vmem_budget // max(per_b, 1)))
    # Aim for >= 4 grid steps when the batch dim allows it: v7x shards the
    # "parallel" axis across 2 TensorCores (>= 2 steps each for pipelining) and
    # the v6e tile sweep favours 4-8 big steps over 1-2.
    if B >= 4:
        bt = min(bt, B // 4)
    # Second-to-last dim of every block must be a multiple of 8 (sublanes)
    # unless the block spans the full array dimension.
    while bt > 1 and ((bt * C) % 8 or (bt * C_out) % 8):
        bt -= 1
    if (bt * C) % 8 or (bt * C_out) % 8:
        bt = B                                      # full-array blocks are always legal
    return bt


def _shortcut_kernel(x_ref, sel_ref, o_ref, *, bt, C, C_out, pad):
    # x_ref:   (bt*C,     H*W)     flattened (batch, channel) rows of this tile
    # sel_ref: (H*W,      H2*W2)   constant 0/1 column-selection matrix
    # o_ref:   (bt*C_out, H2*W2)   padded output rows; channel padding fused here
    sub = jnp.dot(
        x_ref[...], sel_ref[...], preferred_element_type=jnp.float32
    ).astype(o_ref.dtype)

    # Zero the whole block once (covers the pad channels of every batch in the
    # tile), then overwrite the real channel rows batch by batch.  All slices
    # are static Python ints, so this unrolls into plain vector stores.
    o_ref[...] = jnp.zeros_like(o_ref)
    for b in range(bt):
        o_ref[b * C_out + pad: b * C_out + pad + C, :] = sub[b * C:(b + 1) * C, :]


def lambda_layer_shortcut(x, pad):
    """Pallas TPU equivalent of
       F.pad(x[:, :, ::2, ::2], (0, 0, 0, 0, pad, pad), 'constant', 0)."""
    B, C, H, W = x.shape
    H2, W2 = (H + 1) // 2, (W + 1) // 2
    HW, N_out = H * W, H2 * W2
    C_out = C + 2 * pad
    esize = jnp.dtype(x.dtype).itemsize

    # Host-side constant selection matrix (cached per (H, W)); exact in f32/bf16.
    sel = jnp.asarray(_selection_matrix_np(H, W), dtype=x.dtype)

    bt = _pick_batch_tile(B, C, C_out, HW, N_out, esize)
    grid = (pl.cdiv(B, bt),)

    x_rows = x.reshape(B * C, HW)        # free reshape of contiguous NCHW

    kernel = functools.partial(_shortcut_kernel, bt=bt, C=C, C_out=C_out, pad=pad)

    cost = pl.CostEstimate(
        flops=2 * B * C * HW * N_out,
        transcendentals=0,
        bytes_accessed=esize * (B * C * HW + HW * N_out + B * C_out * N_out),
    )

    out_rows = pl.pallas_call(
        kernel,
        out_shape=jax.ShapeDtypeStruct((B * C_out, N_out), x.dtype),
        grid=grid,
        in_specs=[
            pl.BlockSpec((bt * C, HW), lambda i: (i, 0)),
            # Grid-invariant block: Pallas DMAs it once and never re-fetches.
            pl.BlockSpec((HW, N_out), lambda i: (0, 0)),
        ],
        out_specs=pl.BlockSpec((bt * C_out, N_out), lambda i: (i, 0)),
        compiler_params=pltpu.CompilerParams(dimension_semantics=("parallel",)),
        cost_estimate=cost,
    )(x_rows, sel)

    return out_rows.reshape(B, C_out, H2, W2)


def _reference(x, pad):
    sub = x[:, :, ::2, ::2]
    return jnp.pad(sub, ((0, 0), (pad, pad), (0, 0), (0, 0)))


if __name__ == "__main__":
    key = jax.random.PRNGKey(0)

    # ResNet-CIFAR option-A shortcut-like shapes: in_planes=4, planes=8 -> pad=2.
    B, C, H, W = 2, 4, 16, 16
    pad = 2
    x = jax.random.normal(key, (B, C, H, W), dtype=jnp.float32)

    out = jax.block_until_ready(lambda_layer_shortcut(x, pad))
    ref = _reference(x, pad)
    assert out.shape == (B, C + 2 * pad, (H + 1) // 2, (W + 1) // 2), out.shape
    assert jnp.allclose(out, ref, atol=1e-5, rtol=1e-5), "mismatch vs reference"

    # Second small config: exercises a multi-step grid and a different pad.
    B2, C2, H2_, W2_ = 4, 8, 8, 8
    pad2 = 4
    x2 = jax.random.normal(jax.random.PRNGKey(0), (B2, C2, H2_, W2_), dtype=jnp.float32)
    out2 = jax.block_until_ready(lambda_layer_shortcut(x2, pad2))
    ref2 = _reference(x2, pad2)
    assert out2.shape == (B2, C2 + 2 * pad2, H2_ // 2, W2_ // 2), out2.shape
    assert jnp.allclose(out2, ref2, atol=1e-5, rtol=1e-5), "mismatch vs reference (cfg 2)"

    print("KERNEL_OK")
</pallas_src>

<mosaic_0001>
module attributes {stable_mosaic.version = 11 : i64} {
  func.func @_shortcut_kernel(%arg0: i32, %arg1: memref<8x256xf32, #tpu.memory_space<vmem>>, %arg2: memref<256x64xf32, #tpu.memory_space<vmem>>, %arg3: memref<16x64xf32, #tpu.memory_space<vmem>>) attributes {dimension_semantics = [#tpu.dimension_semantics<parallel>], iteration_bounds = array<i64: 1>, scalar_prefetch = 0 : i64, scratch_operands = 0 : i64, tpu.core_type = #tpu.core_type<tc>, window_params = [{transform_indices = @transform_0, window_bounds = array<i64: 8, 256>}, {pipeline_mode = #tpu.pipeline_mode<synchronous>, transform_indices = @transform_1, window_bounds = array<i64: 256, 64>}, {transform_indices = @transform_2, window_bounds = array<i64: 16, 64>}]} {
    %c0 = arith.constant 0 : index
    %c0_0 = arith.constant 0 : index
    %0 = vector.load %arg1[%c0, %c0_0] : memref<8x256xf32, #tpu.memory_space<vmem>>, vector<8x256xf32>
    %c0_1 = arith.constant 0 : index
    %c0_2 = arith.constant 0 : index
    %1 = vector.load %arg2[%c0_1, %c0_2] : memref<256x64xf32, #tpu.memory_space<vmem>>, vector<256x64xf32>
    %cst = arith.constant dense<0.000000e+00> : vector<8x64xf32>
    %2 = tpu.matmul %0, %1, %cst {dimension_numbers = #tpu.dot_dimension_numbers<[1], [0], [0], [1], [0, 0, 1, 1], [], []>} : vector<8x256xf32>, vector<256x64xf32>, vector<8x64xf32> -> vector<8x64xf32>
    %cst_3 = arith.constant 0.000000e+00 : f32
    %3 = vector.broadcast %cst_3 : f32 to vector<16x64xf32>
    %c0_4 = arith.constant 0 : index
    %c0_5 = arith.constant 0 : index
    %4 = vector.load %arg3[%c0_4, %c0_5] : memref<16x64xf32, #tpu.memory_space<vmem>>, vector<16x64xf32>
    tpu.vector_store %arg3[%c0_4, %c0_5], %3 {strides = array<i32>} : memref<16x64xf32, #tpu.memory_space<vmem>>, vector<16x64xf32>,
    %5 = vector.extract_strided_slice %2 {offsets = [0, 0], sizes = [4, 64], strides = [1, 1]} : vector<8x64xf32> to vector<4x64xf32>
    %c2 = arith.constant 2 : index
    %c0_6 = arith.constant 0 : index
    %6 = vector.load %arg3[%c2, %c0_6] : memref<16x64xf32, #tpu.memory_space<vmem>>, vector<4x64xf32>
    tpu.vector_store %arg3[%c2, %c0_6], %5 {strides = array<i32>} : memref<16x64xf32, #tpu.memory_space<vmem>>, vector<4x64xf32>,
    %7 = vector.extract_strided_slice %2 {offsets = [4, 0], sizes = [4, 64], strides = [1, 1]} : vector<8x64xf32> to vector<4x64xf32>
    %c10 = arith.constant 10 : index
    %c0_7 = arith.constant 0 : index
    %8 = vector.load %arg3[%c10, %c0_7] : memref<16x64xf32, #tpu.memory_space<vmem>>, vector<4x64xf32>
    tpu.vector_store %arg3[%c10, %c0_7], %7 {strides = array<i32>} : memref<16x64xf32, #tpu.memory_space<vmem>>, vector<4x64xf32>,
    return
  }
  func.func @transform_0(%arg0: i32) -> (i32, i32) {
    %c0_i32 = arith.constant 0 : i32
    %c0_i32_0 = arith.constant 0 : i32
    return %arg0, %c0_i32 : i32, i32
  }
  func.func @transform_1(%arg0: i32) -> (i32, i32) {
    %c0_i32 = arith.constant 0 : i32
    %c0_i32_0 = arith.constant 0 : i32
    %c0_i32_1 = arith.constant 0 : i32
    return %c0_i32, %c0_i32_0 : i32, i32
  }
  func.func @transform_2(%arg0: i32) -> (i32, i32) {
    %c0_i32 = arith.constant 0 : i32
    %c0_i32_0 = arith.constant 0 : i32
    return %arg0, %c0_i32 : i32, i32
  }
}

</mosaic_0001>

<llo_original>
// kernel: tpu_custom_call.1
$region0: #{tpu_custom_call.1}
  #allocation0 [shape = 'u32[]', space=smem, size = 0x4, offset = 0x4, fixed_abs, tag = 'smem constant byte address 0x4 - core index']
  #allocation1 [shape = 'u32[72,128]{1,0:T(1,128)}', space=vmem, size = 0x9000, scoped, tag = 'internal scratch']
  %s0 = inlined_call_operand.vmem [shape: f32[8,256], index: 0, kind: input, shape index: {}]
  %s1 = inlined_call_operand.vmem [shape: f32[256,64], index: 1, kind: input, shape index: {}]
  %s2 = inlined_call_operand.hbm [shape: f32[16,64], index: 2, kind: output, shape index: {}]
  %s3 = sld [smem:[#allocation0]]
  $region18: #{tpu_custom_call.1} parent=0
    _
  %s5 = ssub.s32 1, %s3
  %s6 = scalar_select 0, %s5, %s3
  $region1: #{tpu_custom_call.1} parent=0
    #allocation2 [shape = 'u8[8192]{0}', space=vmem, size = 0x2000, scoped, tag = 'output window, operand 0, single buffered']
    #allocation3 [shape = 's32[1]{0}', space=sflag, size = 0x4, scoped, tag = 'scoped memory for tpu_custom_call.1']
    %7 = vsyncpa [#allocation3], 0
    // Predicated region
    $region2: #{tpu_custom_call.1} parent=1 // pred_check
      _
    $region3: #{tpu_custom_call.1} parent=1 // pred_check_branch
      %9 = sbr.rel (0) target = $region5
    $region4: #{tpu_custom_call.1} parent=1 // pred_region
      _
    $region5: #{tpu_custom_call.1} parent=1 // pred_fallthru
      _
    // Predicated region
    $region6: #{tpu_custom_call.1} parent=1 // pred_check
      _
    $region7: #{tpu_custom_call.1} parent=1 // pred_check_branch
      %11 = sbr.rel (0) target = $region9
    $region8: #{tpu_custom_call.1} parent=1 // pred_region
      _
    $region9: #{tpu_custom_call.1} parent=1 // pred_fallthru
      _
    %v12 = vld [vmem:[%s0] sm:$0xff]
    %v13 = vld [vmem:[%s0 + $0x8] sm:$0xff]
    %v14 = vld [vmem:[%s1] sm:$0xff]
    %v15 = vld [vmem:[%s1 + $0x8] sm:$0xff]
    %v16 = vld [vmem:[%s1 + $0x10] sm:$0xff]
    %v17 = vld [vmem:[%s1 + $0x18] sm:$0xff]
    %v18 = vld [vmem:[%s1 + $0x20] sm:$0xff]
    %v19 = vld [vmem:[%s1 + $0x28] sm:$0xff]
    %v20 = vld [vmem:[%s1 + $0x30] sm:$0xff]
    %v21 = vld [vmem:[%s1 + $0x38] sm:$0xff]
    %v22 = vld [vmem:[%s1 + $0x40] sm:$0xff]
    %v23 = vld [vmem:[%s1 + $0x48] sm:$0xff]
    %v24 = vld [vmem:[%s1 + $0x50] sm:$0xff]
    %v25 = vld [vmem:[%s1 + $0x58] sm:$0xff]
    %v26 = vld [vmem:[%s1 + $0x60] sm:$0xff]
    %v27 = vld [vmem:[%s1 + $0x68] sm:$0xff]
    %v28 = vld [vmem:[%s1 + $0x70] sm:$0xff]
    %v29 = vld [vmem:[%s1 + $0x78] sm:$0xff]
    %v30 = vld [vmem:[%s1 + $0x80] sm:$0xff]
    %v31 = vld [vmem:[%s1 + $0x88] sm:$0xff]
    %v32 = vld [vmem:[%s1 + $0x90] sm:$0xff]
    %v33 = vld [vmem:[%s1 + $0x98] sm:$0xff]
    %v34 = vld [vmem:[%s1 + $0xa0] sm:$0xff]
    %v35 = vld [vmem:[%s1 + $0xa8] sm:$0xff]
    %v36 = vld [vmem:[%s1 + $0xb0] sm:$0xff]
    %v37 = vld [vmem:[%s1 + $0xb8] sm:$0xff]
    %v38 = vld [vmem:[%s1 + $0xc0] sm:$0xff]
    %v39 = vld [vmem:[%s1 + $0xc8] sm:$0xff]
    %v40 = vld [vmem:[%s1 + $0xd0] sm:$0xff]
    %v41 = vld [vmem:[%s1 + $0xd8] sm:$0xff]
    %v42 = vld [vmem:[%s1 + $0xe0] sm:$0xff]
    %v43 = vld [vmem:[%s1 + $0xe8] sm:$0xff]
    %v44 = vld [vmem:[%s1 + $0xf0] sm:$0xff]
    %v45 = vld [vmem:[%s1 + $0xf8] sm:$0xff]
    %46 = vmatpush.msra.mxu0 %v29
    %47 = vmatpush.msra.mxu0 %v28
    %48 = vmatpush.msra.mxu0 %v27
    %49 = vmatpush.msra.mxu0 %v26
    %50 = vmatpush.msra.mxu0 %v25
    %51 = vmatpush.msra.mxu0 %v24
    %52 = vmatpush.msra.mxu0 %v23
    %53 = vmatpush.msra.mxu0 %v22
    %54 = vmatpush.msra.mxu0 %v21
    %55 = vmatpush.msra.mxu0 %v20
    %56 = vmatpush.msra.mxu0 %v19
    %57 = vmatpush.msra.mxu0 %v18
    %58 = vmatpush.msra.mxu0 %v17
    %59 = vmatpush.msra.mxu0 %v16
    %60 = vmatpush.msra.mxu0 %v15
    %61 = vmatpush.msra.mxu0 %v14
    %62 = vmatmul.f32.gmra.mxu0 %v12
    %v63 = vpop.f32.mrf.mxu0
    %v64 = vadd.f32 0.0, %v63
    %65 = vdwg.mxu0
    %66 = vmatpush.msra.mxu0 %v45
    %67 = vmatpush.msra.mxu0 %v44
    %68 = vmatpush.msra.mxu0 %v43
    %69 = vmatpush.msra.mxu0 %v42
    %70 = vmatpush.msra.mxu0 %v41
    %71 = vmatpush.msra.mxu0 %v40
    %72 = vmatpush.msra.mxu0 %v39
    %73 = vmatpush.msra.mxu0 %v38
    %74 = vmatpush.msra.mxu0 %v37
    %75 = vmatpush.msra.mxu0 %v36
    %76 = vmatpush.msra.mxu0 %v35
    %77 = vmatpush.msra.mxu0 %v34
    %78 = vmatpush.msra.mxu0 %v33
    %79 = vmatpush.msra.mxu0 %v32
    %80 = vmatpush.msra.mxu0 %v31
    %81 = vmatpush.msra.mxu0 %v30
    %82 = vmatmul.f32.gmra.mxu0 %v13
    %v83 = vpop.f32.mrf.mxu0
    %v84 = vadd.f32 %v64, %v83
    %85 = vdwg.mxu0
    %vm86 = vcmask 523264
    %87 = vst.msk [vmem:[#allocation2] sm:$0xff] %vm86, 0.0
    %88 = vst.msk [vmem:[#allocation2 + $0x8] sm:$0xff] %vm86, 0.0
    %vm89 = vcmask 519168
    %90 = vst.msk [vmem:[#allocation2 + $0x2] sm:$0xf] %vm89, %v84
    %vm91 = vcmask 523268
    %92 = vst.msk [vmem:[#allocation2 + $0x6] sm:$0xf0] %vm91, %v84
    // Predicated region
    $region10: #{tpu_custom_call.1} parent=1 // pred_check
      _
    $region11: #{tpu_custom_call.1} parent=1 // pred_check_branch
      %94 = sbr.rel (0) target = $region13
    $region12: #{tpu_custom_call.1} parent=1 // pred_region
      %96 = vsyncadd [#allocation3], 0
      %s97 = sshll.u32 [#allocation2], 4
      %s98 = int_to_ptr.vmem [resolvable:$true] %s97
      %s99 = sshll.u32 %s2, 4
      %s100 = int_to_ptr.hbm [resolvable:$true] %s99
      %105 = dma.vmem_to_hbm [thread:$0]  %s98, 256, %s100, [#allocation3], 128, 128, 8
    $region13: #{tpu_custom_call.1} parent=1 // pred_fallthru
      _
    // Predicated region
    $region14: #{tpu_custom_call.1} parent=1 // pred_check
      _
    $region15: #{tpu_custom_call.1} parent=1 // pred_check_branch
      %107 = sbr.rel (0) target = $region17
    $region16: #{tpu_custom_call.1} parent=1 // pred_region
      %109 = dma.done [#allocation3], 256
    $region17: #{tpu_custom_call.1} parent=1 // pred_fallthru
      _
    %110 = vsyncpa [#allocation3], 1

</llo_original>
